<compile_context>
chip_gen: v6e
topology: v6e:2x2x1
jax: 0.10.0
libtpu: 0.0.40
codegen_flags: <defaults>
</compile_context>

<pallas_src>
import jax
import jax.numpy as jnp
from jax.experimental import pallas as pl
from jax.experimental.pallas import tpu as pltpu


# -----------------------------------------------------------------------------
# Pallas kernel: fused (1x1 conv == channel contraction) + bias + ReLU, NCHW.
# -----------------------------------------------------------------------------
def _conv1x1_bias_relu_kernel(x_ref, w_ref, b_ref, o_ref):
    # x_ref: (bn, Cin, HW)  w_ref: (Cout, Cin)  b_ref: (Cout, 1)  o_ref: (bn, Cout, HW)
    x = x_ref[...]
    w = w_ref[...]
    b = b_ref[...]
    bn, cin, hw = x.shape
    cout = w.shape[0]

    if cin <= 8:
        # Tiny contraction: unrolled VPU broadcast multiply-accumulate.
        # Bias folded into the accumulator init (saves one full-size add).
        acc = jnp.broadcast_to(b[None, :, :], (bn, cout, hw)).astype(jnp.float32)
        for ci in range(cin):
            acc = acc + x[:, ci, :][:, None, :] * w[:, ci][None, :, None]
        y = acc
    else:
        # General path: MXU matmul (batched over bn) with f32 accumulation.
        y = jnp.einsum("oc,nch->noh", w, x,
                       preferred_element_type=jnp.float32) + b[None, :, :]

    o_ref[...] = jnp.maximum(y, 0.0).astype(o_ref.dtype)


def _largest_divisor_leq(n: int, cap: int) -> int:
    cap = max(1, min(n, cap))
    for d in range(cap, 0, -1):
        if n % d == 0:
            return d
    return 1


def _conv1x1_bias_relu(x3d, w_oc, b):
    """x3d: (N, Cin, HW) f32, w_oc: (Cout, Cin) f32, b: (Cout, 1) f32
    -> (N, Cout, HW) f32."""
    N, Cin, HW = x3d.shape
    Cout = w_oc.shape[0]

    # Pick the batch block: largest divisor of N whose double-buffered
    # in+out tiles stay within a conservative VMEM budget.
    bytes_per_item = (Cin + Cout) * HW * 4 * 2  # in + out, double buffered
    budget = 8 * 1024 * 1024                    # 8 MiB, well under scoped VMEM
    bn = _largest_divisor_leq(N, max(1, budget // max(bytes_per_item, 1)))
    grid_n = N // bn

    return pl.pallas_call(
        _conv1x1_bias_relu_kernel,
        out_shape=jax.ShapeDtypeStruct((N, Cout, HW), jnp.float32),
        grid=(grid_n,),
        in_specs=[
            # A block of `bn` images per grid step.
            pl.BlockSpec((bn, Cin, HW), lambda n: (n, 0, 0)),
            # Weight / bias stay resident (same block index every step).
            pl.BlockSpec((Cout, Cin), lambda n: (0, 0)),
            pl.BlockSpec((Cout, 1), lambda n: (0, 0)),
        ],
        out_specs=pl.BlockSpec((bn, Cout, HW), lambda n: (n, 0, 0)),
        compiler_params=pltpu.CompilerParams(
            dimension_semantics=("parallel",),
        ),
    )(x3d, w_oc, b)


# -----------------------------------------------------------------------------
# Inner module (the `module` wrapped by MetaTestParallel): Conv2d(1x1) + ReLU.
# -----------------------------------------------------------------------------
class InnerConvModule:
    """Deterministic synthetic wrapped module. Input/output are NCHW."""

    def __init__(self, in_channels, out_channels, key):
        kw, kb = jax.random.split(key)
        # PyTorch Conv2d weight is (Cout, Cin, 1, 1); stored here as (Cout, Cin).
        self.weight = jax.random.normal(
            kw, (out_channels, in_channels), jnp.float32) * 0.1
        self.bias = jax.random.normal(kb, (out_channels, 1), jnp.float32) * 0.1

    def __call__(self, x_nchw):
        N, C, H, W = x_nchw.shape
        Cout = self.weight.shape[0]
        # NCHW -> (N, C, H*W): contiguous reshape, no transpose / extra HBM traffic.
        x3d = x_nchw.reshape(N, C, H * W)
        y3d = _conv1x1_bias_relu(x3d, self.weight, self.bias)
        # (N, Cout, H*W) -> NCHW: again a free contiguous reshape.
        return y3d.reshape(N, Cout, H, W)


# -----------------------------------------------------------------------------
# MetaTestParallel wrapper (forward-pass semantics of the PyTorch module).
# -----------------------------------------------------------------------------
class MetaTestParallel:
    """Single-device wrapper: scatter(inputs) along `dim` to one device, then
    call the wrapped module on that device.  With a single device id the
    scatter is an identity pass-through (no splitting), exactly as in the
    PyTorch single-GPU meta-test path."""

    def __init__(self, module, dim: int = 0):
        self.dim = dim
        self.device_id = [0]  # single device (matches `module.get_device()` path)
        self.module = module

    def scatter(self, inputs, kwargs, device_ids):
        # Single target device: scatter_kwargs degenerates to the identity —
        # one per-device tuple whose contents are the original args unchanged.
        # Data/model placement is left to JAX's default device / jit, so no
        # per-call jax.device_put in the hot path.
        # TODO(synk): DataContainer handling has no JAX equivalent; plain
        # arrays are passed through unchanged.
        del device_ids
        return (inputs,), (kwargs,)

    def forward(self, *inputs, **kwargs):
        inputs, kwargs = self.scatter(inputs, kwargs, self.device_id)
        if not inputs and (not kwargs):
            inputs = ((),)
            kwargs = ({},)
        return self.module(*inputs[0], **kwargs[0])

    __call__ = forward


# -----------------------------------------------------------------------------
# Main
# -----------------------------------------------------------------------------
if __name__ == "__main__":
    key = jax.random.PRNGKey(0)
    k_x, k_m = jax.random.split(key)

    # Small NCHW input consistent with an mmaction-style 2D head.
    N, C_in, H, W = 2, 4, 16, 16
    C_out = 8
    x = jax.random.normal(k_x, (N, C_in, H, W), jnp.float32)

    inner = InnerConvModule(C_in, C_out, k_m)
    model = MetaTestParallel(inner, dim=0)

    out = model(x)
    out = jax.block_until_ready(out)

    # Correctness check against a pure-JAX reference of the wrapped module.
    ref = jnp.maximum(
        jnp.einsum("nchw,oc->nohw", x, inner.weight)
        + inner.bias[:, 0][None, :, None, None],
        0.0,
    )
    assert out.shape == (N, C_out, H, W)
    assert jnp.allclose(out, ref, atol=1e-5, rtol=1e-5)

    print("KERNEL_OK")
</pallas_src>

<mosaic_0001>
module attributes {stable_mosaic.version = 11 : i64} {
  func.func @_conv1x1_bias_relu_kernel(%arg0: i32, %arg1: memref<2x4x256xf32, #tpu.memory_space<vmem>>, %arg2: memref<8x4xf32, #tpu.memory_space<vmem>>, %arg3: memref<8x1xf32, #tpu.memory_space<vmem>>, %arg4: memref<2x8x256xf32, #tpu.memory_space<vmem>>) attributes {dimension_semantics = [#tpu.dimension_semantics<parallel>], iteration_bounds = array<i64: 1>, scalar_prefetch = 0 : i64, scratch_operands = 0 : i64, tpu.core_type = #tpu.core_type<tc>, window_params = [{transform_indices = @transform_0, window_bounds = array<i64: 2, 4, 256>}, {pipeline_mode = #tpu.pipeline_mode<synchronous>, transform_indices = @transform_1, window_bounds = array<i64: 8, 4>}, {pipeline_mode = #tpu.pipeline_mode<synchronous>, transform_indices = @transform_2, window_bounds = array<i64: 8, 1>}, {transform_indices = @transform_3, window_bounds = array<i64: 2, 8, 256>}]} {
    %c0 = arith.constant 0 : index
    %c0_0 = arith.constant 0 : index
    %c0_1 = arith.constant 0 : index
    %0 = vector.load %arg1[%c0, %c0_0, %c0_1] : memref<2x4x256xf32, #tpu.memory_space<vmem>>, vector<2x4x256xf32>
    %c0_2 = arith.constant 0 : index
    %c0_3 = arith.constant 0 : index
    %1 = vector.load %arg2[%c0_2, %c0_3] : memref<8x4xf32, #tpu.memory_space<vmem>>, vector<8x4xf32>
    %c0_4 = arith.constant 0 : index
    %c0_5 = arith.constant 0 : index
    %2 = vector.load %arg3[%c0_4, %c0_5] : memref<8x1xf32, #tpu.memory_space<vmem>>, vector<8x1xf32>
    %3 = vector.shape_cast %2 : vector<8x1xf32> to vector<1x8x1xf32>
    %4 = vector.shape_cast %3 : vector<1x8x1xf32> to vector<1x8x1xf32>
    %5 = vector.broadcast %4 : vector<1x8x1xf32> to vector<2x8x256xf32>
    %6 = vector.extract_strided_slice %0 {offsets = [0, 0, 0], sizes = [2, 1, 256], strides = [1, 1, 1]} : vector<2x4x256xf32> to vector<2x1x256xf32>
    %7 = vector.shape_cast %6 : vector<2x1x256xf32> to vector<2x256xf32>
    %8 = vector.shape_cast %7 : vector<2x256xf32> to vector<2x1x256xf32>
    %9 = vector.extract_strided_slice %1 {offsets = [0, 0], sizes = [8, 1], strides = [1, 1]} : vector<8x4xf32> to vector<8x1xf32>
    %10 = vector.shape_cast %9 : vector<8x1xf32> to vector<8xf32>
    %11 = vector.shape_cast %10 : vector<8xf32> to vector<1x8x1xf32>
    %12 = vector.broadcast %8 : vector<2x1x256xf32> to vector<2x8x256xf32>
    %13 = vector.broadcast %11 : vector<1x8x1xf32> to vector<2x8x256xf32>
    %14 = arith.mulf %12, %13 : vector<2x8x256xf32>
    %15 = arith.addf %5, %14 : vector<2x8x256xf32>
    %16 = vector.extract_strided_slice %0 {offsets = [0, 1, 0], sizes = [2, 1, 256], strides = [1, 1, 1]} : vector<2x4x256xf32> to vector<2x1x256xf32>
    %17 = vector.shape_cast %16 : vector<2x1x256xf32> to vector<2x256xf32>
    %18 = vector.shape_cast %17 : vector<2x256xf32> to vector<2x1x256xf32>
    %19 = vector.extract_strided_slice %1 {offsets = [0, 1], sizes = [8, 1], strides = [1, 1]} : vector<8x4xf32> to vector<8x1xf32>
    %20 = vector.shape_cast %19 : vector<8x1xf32> to vector<8xf32>
    %21 = vector.shape_cast %20 : vector<8xf32> to vector<1x8x1xf32>
    %22 = vector.broadcast %18 : vector<2x1x256xf32> to vector<2x8x256xf32>
    %23 = vector.broadcast %21 : vector<1x8x1xf32> to vector<2x8x256xf32>
    %24 = arith.mulf %22, %23 : vector<2x8x256xf32>
    %25 = arith.addf %15, %24 : vector<2x8x256xf32>
    %26 = vector.extract_strided_slice %0 {offsets = [0, 2, 0], sizes = [2, 1, 256], strides = [1, 1, 1]} : vector<2x4x256xf32> to vector<2x1x256xf32>
    %27 = vector.shape_cast %26 : vector<2x1x256xf32> to vector<2x256xf32>
    %28 = vector.shape_cast %27 : vector<2x256xf32> to vector<2x1x256xf32>
    %29 = vector.extract_strided_slice %1 {offsets = [0, 2], sizes = [8, 1], strides = [1, 1]} : vector<8x4xf32> to vector<8x1xf32>
    %30 = vector.shape_cast %29 : vector<8x1xf32> to vector<8xf32>
    %31 = vector.shape_cast %30 : vector<8xf32> to vector<1x8x1xf32>
    %32 = vector.broadcast %28 : vector<2x1x256xf32> to vector<2x8x256xf32>
    %33 = vector.broadcast %31 : vector<1x8x1xf32> to vector<2x8x256xf32>
    %34 = arith.mulf %32, %33 : vector<2x8x256xf32>
    %35 = arith.addf %25, %34 : vector<2x8x256xf32>
    %36 = vector.extract_strided_slice %0 {offsets = [0, 3, 0], sizes = [2, 1, 256], strides = [1, 1, 1]} : vector<2x4x256xf32> to vector<2x1x256xf32>
    %37 = vector.shape_cast %36 : vector<2x1x256xf32> to vector<2x256xf32>
    %38 = vector.shape_cast %37 : vector<2x256xf32> to vector<2x1x256xf32>
    %39 = vector.extract_strided_slice %1 {offsets = [0, 3], sizes = [8, 1], strides = [1, 1]} : vector<8x4xf32> to vector<8x1xf32>
    %40 = vector.shape_cast %39 : vector<8x1xf32> to vector<8xf32>
    %41 = vector.shape_cast %40 : vector<8xf32> to vector<1x8x1xf32>
    %42 = vector.broadcast %38 : vector<2x1x256xf32> to vector<2x8x256xf32>
    %43 = vector.broadcast %41 : vector<1x8x1xf32> to vector<2x8x256xf32>
    %44 = arith.mulf %42, %43 : vector<2x8x256xf32>
    %45 = arith.addf %35, %44 : vector<2x8x256xf32>
    %cst = arith.constant 0.000000e+00 : f32
    %46 = vector.broadcast %cst : f32 to vector<2x8x256xf32>
    %47 = arith.maximumf %45, %46 : vector<2x8x256xf32>
    %c0_6 = arith.constant 0 : index
    %c0_7 = arith.constant 0 : index
    %c0_8 = arith.constant 0 : index
    %48 = vector.load %arg4[%c0_6, %c0_7, %c0_8] : memref<2x8x256xf32, #tpu.memory_space<vmem>>, vector<2x8x256xf32>
    tpu.vector_store %arg4[%c0_6, %c0_7, %c0_8], %47 {strides = array<i32>} : memref<2x8x256xf32, #tpu.memory_space<vmem>>, vector<2x8x256xf32>,
    return
  }
  func.func @transform_0(%arg0: i32) -> (i32, i32, i32) {
    %c0_i32 = arith.constant 0 : i32
    %c0_i32_0 = arith.constant 0 : i32
    %c0_i32_1 = arith.constant 0 : i32
    return %arg0, %c0_i32, %c0_i32_0 : i32, i32, i32
  }
  func.func @transform_1(%arg0: i32) -> (i32, i32) {
    %c0_i32 = arith.constant 0 : i32
    %c0_i32_0 = arith.constant 0 : i32
    %c0_i32_1 = arith.constant 0 : i32
    return %c0_i32, %c0_i32_0 : i32, i32
  }
  func.func @transform_2(%arg0: i32) -> (i32, i32) {
    %c0_i32 = arith.constant 0 : i32
    %c0_i32_0 = arith.constant 0 : i32
    %c0_i32_1 = arith.constant 0 : i32
    return %c0_i32, %c0_i32_0 : i32, i32
  }
  func.func @transform_3(%arg0: i32) -> (i32, i32, i32) {
    %c0_i32 = arith.constant 0 : i32
    %c0_i32_0 = arith.constant 0 : i32
    %c0_i32_1 = arith.constant 0 : i32
    return %arg0, %c0_i32, %c0_i32_0 : i32, i32, i32
  }
}

</mosaic_0001>

<llo_original>
// kernel: tpu_custom_call.1
$region0: #{tpu_custom_call.1}
  #allocation0 [shape = 'u32[]', space=smem, size = 0x4, offset = 0x4, fixed_abs, tag = 'smem constant byte address 0x4 - core index']
  #allocation1 [shape = 'u32[144,128]{1,0:T(1,128)}', space=vmem, size = 0x12000, scoped, tag = 'internal scratch']
  %s0 = inlined_call_operand.vmem [shape: f32[2,4,256], index: 0, kind: input, shape index: {}]
  %s1 = inlined_call_operand.vmem [shape: f32[8,4], index: 1, kind: input, shape index: {}]
  %s2 = inlined_call_operand.vmem [shape: f32[8,1], index: 2, kind: input, shape index: {}]
  %s3 = inlined_call_operand.hbm [shape: f32[2,8,256], index: 3, kind: output, shape index: {}]
  %s4 = sld [smem:[#allocation0]]
  $region22: #{tpu_custom_call.1} parent=0
    _
  %s6 = ssub.s32 1, %s4
  %s7 = scalar_select 0, %s6, %s4
  $region1: #{tpu_custom_call.1} parent=0
    #allocation2 [shape = 'u8[16384]{0}', space=vmem, size = 0x4000, scoped, tag = 'output window, operand 0, single buffered']
    #allocation3 [shape = 's32[1]{0}', space=sflag, size = 0x4, scoped, tag = 'scoped memory for tpu_custom_call.1']
    %8 = vsyncpa [#allocation3], 0
    // Predicated region
    $region2: #{tpu_custom_call.1} parent=1 // pred_check
      _
    $region3: #{tpu_custom_call.1} parent=1 // pred_check_branch
      %10 = sbr.rel (0) target = $region5
    $region4: #{tpu_custom_call.1} parent=1 // pred_region
      _
    $region5: #{tpu_custom_call.1} parent=1 // pred_fallthru
      _
    // Predicated region
    $region6: #{tpu_custom_call.1} parent=1 // pred_check
      _
    $region7: #{tpu_custom_call.1} parent=1 // pred_check_branch
      %12 = sbr.rel (0) target = $region9
    $region8: #{tpu_custom_call.1} parent=1 // pred_region
      _
    $region9: #{tpu_custom_call.1} parent=1 // pred_fallthru
      _
    // Predicated region
    $region10: #{tpu_custom_call.1} parent=1 // pred_check
      _
    $region11: #{tpu_custom_call.1} parent=1 // pred_check_branch
      %14 = sbr.rel (0) target = $region13
    $region12: #{tpu_custom_call.1} parent=1 // pred_region
      _
    $region13: #{tpu_custom_call.1} parent=1 // pred_fallthru
      _
    %v15 = vld [vmem:[%s0] sm:$0xff]
    %v16 = vld [vmem:[%s0 + $0x8] sm:$0xff]
    %v17 = vld [vmem:[%s1] sm:$0xff]
    %v18 = vld [vmem:[%s2] sm:$0xff]
    %20 = vset.pattern.permute.xlu0 0
    %21 = vperm.xlu0 %20, %v18
    %v22 = vpop.permute.xlu0 %21
    %v26 = vlaneseq
    %v27 = vshrl.u32 %v26, 7
    %v28 = vsub.s32 0, %v27
    %v29 = vrot.slane %v15, %v28
    %v30 = vlaneseq
    %v31 = vshrl.u32 %v30, 7
    %v32 = vsub.s32 4, %v31
    %v33 = vrot.slane %v15, %v32
    %v34 = vlaneseq
    %v35 = vshrl.u32 %v34, 7
    %v36 = vsub.s32 0, %v35
    %v37 = vrot.slane %v16, %v36
    %v38 = vlaneseq
    %v39 = vshrl.u32 %v38, 7
    %v40 = vsub.s32 4, %v39
    %v41 = vrot.slane %v16, %v40
    %v46 = vlaneseq
    %v47 = vshrl.u32 %v46, 7
    %v48 = vsub.s32 0, %v47
    %v49 = vrot.slane %v29, %v48
    %v50 = vlaneseq
    %v51 = vshrl.u32 %v50, 7
    %v52 = vsub.s32 0, %v51
    %v53 = vrot.slane %v33, %v52
    %v54 = vlaneseq
    %v55 = vshrl.u32 %v54, 7
    %v56 = vsub.s32 0, %v55
    %v57 = vrot.slane %v37, %v56
    %v58 = vlaneseq
    %v59 = vshrl.u32 %v58, 7
    %v60 = vsub.s32 0, %v59
    %v61 = vrot.slane %v41, %v60
    %63 = vset.pattern.permute.xlu0 0
    %64 = vperm.xlu0 %63, %v17
    %v65 = vpop.permute.xlu0 %64
    %v67 = vmul.f32 %v49, %v65
    %v68 = vmul.f32 %v53, %v65
    %v69 = vmul.f32 %v57, %v65
    %v70 = vmul.f32 %v61, %v65
    %v71 = vadd.f32 %v22, %v67
    %v72 = vadd.f32 %v22, %v68
    %v73 = vadd.f32 %v22, %v69
    %v74 = vadd.f32 %v22, %v70
    %v75 = vlaneseq
    %v76 = vshrl.u32 %v75, 7
    %v77 = vsub.s32 1, %v76
    %v78 = vrot.slane %v15, %v77
    %v79 = vlaneseq
    %v80 = vshrl.u32 %v79, 7
    %v81 = vsub.s32 5, %v80
    %v82 = vrot.slane %v15, %v81
    %v83 = vlaneseq
    %v84 = vshrl.u32 %v83, 7
    %v85 = vsub.s32 1, %v84
    %v86 = vrot.slane %v16, %v85
    %v87 = vlaneseq
    %v88 = vshrl.u32 %v87, 7
    %v89 = vsub.s32 5, %v88
    %v90 = vrot.slane %v16, %v89
    %v95 = vlaneseq
    %v96 = vshrl.u32 %v95, 7
    %v97 = vsub.s32 1, %v96
    %v98 = vrot.slane %v78, %v97
    %v99 = vlaneseq
    %v100 = vshrl.u32 %v99, 7
    %v101 = vsub.s32 1, %v100
    %v102 = vrot.slane %v82, %v101
    %v103 = vlaneseq
    %v104 = vshrl.u32 %v103, 7
    %v105 = vsub.s32 1, %v104
    %v106 = vrot.slane %v86, %v105
    %v107 = vlaneseq
    %v108 = vshrl.u32 %v107, 7
    %v109 = vsub.s32 1, %v108
    %v110 = vrot.slane %v90, %v109
    %111 = vset.pattern.permute.xlu0 1
    %112 = vperm.xlu0 %111, %v17
    %v113 = vpop.permute.xlu0 %112
    %v115 = vmul.f32 %v98, %v113
    %v116 = vmul.f32 %v102, %v113
    %v117 = vmul.f32 %v106, %v113
    %v118 = vmul.f32 %v110, %v113
    %v119 = vadd.f32 %v71, %v115
    %v120 = vadd.f32 %v72, %v116
    %v121 = vadd.f32 %v73, %v117
    %v122 = vadd.f32 %v74, %v118
    %v123 = vlaneseq
    %v124 = vshrl.u32 %v123, 7
    %v125 = vsub.s32 2, %v124
    %v126 = vrot.slane %v15, %v125
    %v127 = vlaneseq
    %v128 = vshrl.u32 %v127, 7
    %v129 = vsub.s32 6, %v128
    %v130 = vrot.slane %v15, %v129
    %v131 = vlaneseq
    %v132 = vshrl.u32 %v131, 7
    %v133 = vsub.s32 2, %v132
    %v134 = vrot.slane %v16, %v133
    %v135 = vlaneseq
    %v136 = vshrl.u32 %v135, 7
    %v137 = vsub.s32 6, %v136
    %v138 = vrot.slane %v16, %v137
    %v143 = vlaneseq
    %v144 = vshrl.u32 %v143, 7
    %v145 = vsub.s32 2, %v144
    %v146 = vrot.slane %v126, %v145
    %v147 = vlaneseq
    %v148 = vshrl.u32 %v147, 7
    %v149 = vsub.s32 2, %v148
    %v150 = vrot.slane %v130, %v149
    %v151 = vlaneseq
    %v152 = vshrl.u32 %v151, 7
    %v153 = vsub.s32 2, %v152
    %v154 = vrot.slane %v134, %v153
    %v155 = vlaneseq
    %v156 = vshrl.u32 %v155, 7
    %v157 = vsub.s32 2, %v156
    %v158 = vrot.slane %v138, %v157
    %159 = vset.pattern.permute.xlu0 2
    %160 = vperm.xlu0 %159, %v17
    %v161 = vpop.permute.xlu0 %160
    %v163 = vmul.f32 %v146, %v161
    %v164 = vmul.f32 %v150, %v161
    %v165 = vmul.f32 %v154, %v161
    %v166 = vmul.f32 %v158, %v161
    %v167 = vadd.f32 %v119, %v163
    %v168 = vadd.f32 %v120, %v164
    %v169 = vadd.f32 %v121, %v165
    %v170 = vadd.f32 %v122, %v166
    %v171 = vlaneseq
    %v172 = vshrl.u32 %v171, 7
    %v173 = vsub.s32 3, %v172
    %v174 = vrot.slane %v15, %v173
    %v175 = vlaneseq
    %v176 = vshrl.u32 %v175, 7
    %v177 = vsub.s32 7, %v176
    %v178 = vrot.slane %v15, %v177
    %v179 = vlaneseq
    %v180 = vshrl.u32 %v179, 7
    %v181 = vsub.s32 3, %v180
    %v182 = vrot.slane %v16, %v181
    %v183 = vlaneseq
    %v184 = vshrl.u32 %v183, 7
    %v185 = vsub.s32 7, %v184
    %v186 = vrot.slane %v16, %v185
    %v191 = vlaneseq
    %v192 = vshrl.u32 %v191, 7
    %v193 = vsub.s32 3, %v192
    %v194 = vrot.slane %v174, %v193
    %v195 = vlaneseq
    %v196 = vshrl.u32 %v195, 7
    %v197 = vsub.s32 3, %v196
    %v198 = vrot.slane %v178, %v197
    %v199 = vlaneseq
    %v200 = vshrl.u32 %v199, 7
    %v201 = vsub.s32 3, %v200
    %v202 = vrot.slane %v182, %v201
    %v203 = vlaneseq
    %v204 = vshrl.u32 %v203, 7
    %v205 = vsub.s32 3, %v204
    %v206 = vrot.slane %v186, %v205
    %207 = vset.pattern.permute.xlu0 3
    %208 = vperm.xlu0 %207, %v17
    %v209 = vpop.permute.xlu0 %208
    %v211 = vmul.f32 %v194, %v209
    %v212 = vmul.f32 %v198, %v209
    %v213 = vmul.f32 %v202, %v209
    %v214 = vmul.f32 %v206, %v209
    %v215 = vadd.f32 %v167, %v211
    %v216 = vadd.f32 %v168, %v212
    %v217 = vadd.f32 %v169, %v213
    %v218 = vadd.f32 %v170, %v214
    %v219 = vmax.f32 %v215, 0.0
    %v220 = vmax.f32 %v216, 0.0
    %v221 = vmax.f32 %v217, 0.0
    %v222 = vmax.f32 %v218, 0.0
    %223 = vst [vmem:[#allocation2] sm:$0xff] %v219
    %224 = vst [vmem:[#allocation2 + $0x8] sm:$0xff] %v220
    %225 = vst [vmem:[#allocation2 + $0x10] sm:$0xff] %v221
    %226 = vst [vmem:[#allocation2 + $0x18] sm:$0xff] %v222
    // Predicated region
    $region14: #{tpu_custom_call.1} parent=1 // pred_check
      _
    $region15: #{tpu_custom_call.1} parent=1 // pred_check_branch
      %228 = sbr.rel (0) target = $region17
    $region16: #{tpu_custom_call.1} parent=1 // pred_region
      %s230 = ssub.s32 512, 512
      %231 = vsyncadd [#allocation3], %s230
      %s232 = sshll.u32 [#allocation2], 4
      %s233 = int_to_ptr.vmem [resolvable:$true] %s232
      %238 = dma.vmem_to_hbm [thread:$0]  %s233, 512, %s3, [#allocation3], 256, 256, 16
    $region17: #{tpu_custom_call.1} parent=1 // pred_fallthru
      _
    // Predicated region
    $region18: #{tpu_custom_call.1} parent=1 // pred_check
      _
    $region19: #{tpu_custom_call.1} parent=1 // pred_check_branch
      %240 = sbr.rel (0) target = $region21
    $region20: #{tpu_custom_call.1} parent=1 // pred_region
      %241 = dma.done [#allocation3], 512
    $region21: #{tpu_custom_call.1} parent=1 // pred_fallthru
      _
    %242 = vsyncpa [#allocation3], 1

</llo_original>
